<compile_context>
chip_gen: v7x
topology: tpu7x:2x2x1
jax: 0.10.0
libtpu: 0.0.40
codegen_flags: <defaults>
</compile_context>

<pallas_src>
import jax
import jax.numpy as jnp
from jax.experimental import pallas as pl
from jax.experimental.pallas import tpu as pltpu

_LANE = 128


def _pos_enc_kernel(x_ref, pos_ref, o_ref):
    # x_ref: (bt, lt), pos_ref: (1, lt) broadcasts over sublanes in the add.
    o_ref[...] = x_ref[...] + pos_ref[...]


def _sublane_unit(dtype):
    itemsize = jnp.dtype(dtype).itemsize
    if itemsize >= 4:
        return 8
    if itemsize == 2:
        return 16
    return 32


def _round_up(n, unit):
    return ((n + unit - 1) // unit) * unit


def _divisor_tile(dim, unit, max_tile):
    """Largest multiple of `unit` that divides `dim` and is <= max_tile.
    `dim` is always a multiple of `unit` here (we pad wrapper-side)."""
    if dim % unit != 0:  # defensive only; padding guarantees alignment
        return dim
    t = min(dim, max(unit, (max_tile // unit) * unit))
    while t >= unit:
        if dim % t == 0:
            return t
        t -= unit
    return dim


def positional_encoding_batched(
    x,
    emb_table,
    *,
    target_tile_bytes=4 << 20,
    lane_tile_cap=32768,
    min_pallas_bytes=1 << 20,
):
    """x: [B, S, D]; emb_table: [num_positions, D] with num_positions >= S."""
    B, S, D = x.shape
    L = S * D

    # Match PyTorch promotion semantics for `x + emb(indices)`.
    out_dtype = jnp.promote_types(x.dtype, emb_table.dtype)
    itemsize = jnp.dtype(out_dtype).itemsize

    # Rows 0..S-1 of the table == emb(arange(S)), flattened to one lane-dense row.
    pos_row = emb_table[:S, :].astype(out_dtype).reshape(1, L)
    x2 = x.astype(out_dtype).reshape(B, L)

    # Tiny-input fast path: Pallas launch + DMA setup dominates; let XLA fuse it.
    if B * L * itemsize < min_pallas_bytes:
        return (x2 + pos_row).reshape(B, S, D).astype(out_dtype)

    sub = _sublane_unit(out_dtype)

    # Pad to (sublane, lane)-aligned shapes: dense stores, no full-dim fallback.
    Lp = _round_up(L, _LANE)
    Bp = _round_up(B, sub)
    if Lp != L:
        x2 = jnp.pad(x2, ((0, 0), (0, Lp - L)))
        pos_row = jnp.pad(pos_row, ((0, 0), (0, Lp - L)))
    if Bp != B:
        x2 = jnp.pad(x2, ((0, Bp - B), (0, 0)))

    # Lane-biased tile: up to 32768 lanes (128 KiB/row for f32), then pick the
    # row count so one x block is ~target_tile_bytes (>= sublane unit rows).
    lt = _divisor_tile(Lp, _LANE, min(Lp, lane_tile_cap))
    target_rows = max(sub, target_tile_bytes // max(1, lt * itemsize))
    bt = _divisor_tile(Bp, sub, min(Bp, target_rows))

    n_l = Lp // lt
    n_b = Bp // bt

    out2 = pl.pallas_call(
        _pos_enc_kernel,
        out_shape=jax.ShapeDtypeStruct((Bp, Lp), out_dtype),
        grid_spec=pltpu.PrefetchScalarGridSpec(
            num_scalar_prefetch=0,
            # Lane axis outermost, batch axis innermost: the pos block index
            # depends only on the lane axis, so it stays VMEM-resident across
            # all consecutive batch-tile steps (no re-DMA).
            grid=(n_l, n_b),
            in_specs=[
                pl.BlockSpec((bt, lt), lambda lj, bi: (bi, lj)),
                pl.BlockSpec((1, lt), lambda lj, bi: (0, lj)),
            ],
            out_specs=pl.BlockSpec((bt, lt), lambda lj, bi: (bi, lj)),
        ),
        # Output reuses the x buffer (same (Bp, Lp)/dtype); saves an HBM alloc.
        input_output_aliases={0: 0},
        compiler_params=pltpu.CompilerParams(
            dimension_semantics=("parallel", "parallel"),
            vmem_limit_bytes=32 * 1024 * 1024,
        ),
    )(x2, pos_row)

    return out2[:B, :L].reshape(B, S, D)


def positional_encoding_unbatched(x, emb_table, **kwargs):
    """x: [S, D] (non-batched path) — reuse the batched kernel."""
    return positional_encoding_batched(x[None, :, :], emb_table, **kwargs)[0]


if __name__ == "__main__":
    key = jax.random.PRNGKey(0)
    k_x, k_emb = jax.random.split(key)

    # Module config: d_model=32, num_positions=20, batched=True
    d_model = 32
    num_positions = 20
    batch = 2
    seq_len = 8

    # Deterministic synthetic parameters (nn.Embedding weight ~ N(0, 1)).
    emb_table = jax.random.normal(k_emb, (num_positions, d_model), dtype=jnp.float32)
    x = jax.random.normal(k_x, (batch, seq_len, d_model), dtype=jnp.float32)
    ref = x + emb_table[:seq_len, :][None, :, :]

    # Force the Pallas path (demo input is tiny; min_pallas_bytes=0 bypasses
    # the XLA fast path so the kernel itself is exercised).
    out = positional_encoding_batched(x, emb_table, min_pallas_bytes=0)
    out = jax.block_until_ready(out)
    assert out.shape == x.shape and out.dtype == ref.dtype
    assert jnp.allclose(out, ref, atol=1e-6, rtol=1e-6)

    # Non-batched Pallas path.
    xs = jax.random.normal(k_x, (seq_len, d_model), dtype=jnp.float32)
    outs = jax.block_until_ready(
        positional_encoding_unbatched(xs, emb_table, min_pallas_bytes=0)
    )
    refs = xs + emb_table[:seq_len, :]
    assert outs.shape == xs.shape and jnp.allclose(outs, refs, atol=1e-6, rtol=1e-6)

    # Default-config path (tiny input -> XLA fast path) for API coverage.
    out_fast = jax.block_until_ready(positional_encoding_batched(x, emb_table))
    assert jnp.allclose(out_fast, ref, atol=1e-6, rtol=1e-6)

    print("KERNEL_OK")
</pallas_src>

<mosaic_0001>
module attributes {stable_mosaic.version = 11 : i64} {
  func.func @_pos_enc_kernel(%arg0: i32, %arg1: i32, %arg2: memref<8x256xf32, #tpu.memory_space<vmem>>, %arg3: memref<1x256xf32, #tpu.memory_space<vmem>>, %arg4: memref<8x256xf32, #tpu.memory_space<vmem>>) attributes {dimension_semantics = [#tpu.dimension_semantics<parallel>, #tpu.dimension_semantics<parallel>], iteration_bounds = array<i64: 1, 1>, scalar_prefetch = 0 : i64, scratch_operands = 0 : i64, tpu.core_type = #tpu.core_type<tc>, window_params = [{transform_indices = @transform_0, window_bounds = array<i64: 8, 256>}, {transform_indices = @transform_1, window_bounds = array<i64: 1, 256>}, {transform_indices = @transform_2, window_bounds = array<i64: 8, 256>}]} {
    %c0 = arith.constant 0 : index
    %c0_0 = arith.constant 0 : index
    %0 = vector.load %arg2[%c0, %c0_0] : memref<8x256xf32, #tpu.memory_space<vmem>>, vector<8x256xf32>
    %c0_1 = arith.constant 0 : index
    %c0_2 = arith.constant 0 : index
    %1 = vector.load %arg3[%c0_1, %c0_2] : memref<1x256xf32, #tpu.memory_space<vmem>>, vector<1x256xf32>
    %2 = vector.broadcast %1 : vector<1x256xf32> to vector<8x256xf32>
    %3 = arith.addf %0, %2 : vector<8x256xf32>
    %c0_3 = arith.constant 0 : index
    %c0_4 = arith.constant 0 : index
    %4 = vector.load %arg4[%c0_3, %c0_4] : memref<8x256xf32, #tpu.memory_space<vmem>>, vector<8x256xf32>
    tpu.vector_store %arg4[%c0_3, %c0_4], %3 {strides = array<i32>} : memref<8x256xf32, #tpu.memory_space<vmem>>, vector<8x256xf32>,
    return
  }
  func.func @transform_0(%arg0: i32, %arg1: i32) -> (i32, i32) {
    %c0_i32 = arith.constant 0 : i32
    return %arg1, %arg0 : i32, i32
  }
  func.func @transform_1(%arg0: i32, %arg1: i32) -> (i32, i32) {
    %c0_i32 = arith.constant 0 : i32
    %c0_i32_0 = arith.constant 0 : i32
    return %c0_i32, %arg0 : i32, i32
  }
  func.func @transform_2(%arg0: i32, %arg1: i32) -> (i32, i32) {
    %c0_i32 = arith.constant 0 : i32
    return %arg1, %arg0 : i32, i32
  }
}

</mosaic_0001>

<llo_original>
// kernel: tpu_custom_call.1
$region0: #{tpu_custom_call.1}
  #allocation0 [shape = 'u32[]', space=smem, size = 0x4, offset = 0x4, fixed_abs, tag = 'smem constant byte address 0x4 - core index']
  #allocation1 [shape = 'u32[144,128]{1,0:T(1,128)}', space=vmem, size = 0x12000, scoped, tag = 'internal scratch']
  %s0 = inlined_call_operand.hbm [shape: f32[8,256], index: 0, kind: input, shape index: {}, may-alias: {0,2}]
  %s1 = inlined_call_operand.vmem [shape: f32[1,256], index: 1, kind: input, shape index: {}]
  %s2 = inlined_call_operand.hbm [shape: f32[8,256], index: 2, kind: output, shape index: {}, may-alias: {0,2}]
  %s3 = sld [smem:[#allocation0]]
  $region22: #{tpu_custom_call.1} parent=0
    _
  %s5 = ssub.s32 1, %s3
  %s6 = scalar_select 0, %s5, %s3
  $region1: #{tpu_custom_call.1} parent=0
    #allocation2 [shape = 'u8[8192]{0}', space=vmem, size = 0x2000, scoped, tag = 'input window, operand 0, single buffered']
    #allocation3 [shape = 's32[1]{0}', space=sflag, size = 0x4, scoped, tag = 'scoped memory for tpu_custom_call.1']
    #allocation4 [shape = 's32[1]{0}', space=sflag, size = 0x4, scoped, tag = 'scoped memory for tpu_custom_call.1']
    #allocation5 [shape = 'u8[8192]{0}', space=vmem, size = 0x2000, scoped, tag = 'output window, operand 0, single buffered']
    %7 = vsyncpa [#allocation3], 0
    %8 = vsyncpa [#allocation4], 0
    // Predicated region
    $region2: #{tpu_custom_call.1} parent=1 // pred_check
      _
    $region3: #{tpu_custom_call.1} parent=1 // pred_check_branch
      %10 = sbr.rel (0) target = $region5
    $region4: #{tpu_custom_call.1} parent=1 // pred_region
      %s12 = ssub.s32 256, 256
      %13 = vsyncadd [#allocation3], %s12
      %s15 = sshll.u32 [#allocation2], 4
      %s16 = int_to_ptr.vmem [resolvable:$true] %s15
      %18 = dma.hbm_to_vmem [thread:$0]  %s0, 256, %s16, [#allocation3]
    $region5: #{tpu_custom_call.1} parent=1 // pred_fallthru
      _
    // Predicated region
    $region6: #{tpu_custom_call.1} parent=1 // pred_check
      _
    $region7: #{tpu_custom_call.1} parent=1 // pred_check_branch
      %20 = sbr.rel (0) target = $region9
    $region8: #{tpu_custom_call.1} parent=1 // pred_region
      _
    $region9: #{tpu_custom_call.1} parent=1 // pred_fallthru
      _
    // Predicated region
    $region10: #{tpu_custom_call.1} parent=1 // pred_check
      _
    $region11: #{tpu_custom_call.1} parent=1 // pred_check_branch
      %22 = sbr.rel (0) target = $region13
    $region12: #{tpu_custom_call.1} parent=1 // pred_region
      %23 = dma.done [#allocation3], 256
    $region13: #{tpu_custom_call.1} parent=1 // pred_fallthru
      _
    %v24 = vld [vmem:[#allocation2] sm:$0xff]
    %v25 = vld [vmem:[#allocation2 + $0x8] sm:$0xff]
    %v26 = vld [vmem:[%s1] sm:$0x3]
    %v28 = vlaneseq
    %v29 = vshrl.u32 %v28, 7
    %v30 = vsub.s32 0, %v29
    %v31 = vrot.slane %v26, %v30
    %v32 = vlaneseq
    %v33 = vshrl.u32 %v32, 7
    %v34 = vsub.s32 1, %v33
    %v35 = vrot.slane %v26, %v34
    %v38 = vadd.f32 %v24, %v31
    %v39 = vadd.f32 %v25, %v35
    %40 = vst [vmem:[#allocation5] sm:$0xff] %v38
    %41 = vst [vmem:[#allocation5 + $0x8] sm:$0xff] %v39
    // Predicated region
    $region14: #{tpu_custom_call.1} parent=1 // pred_check
      _
    $region15: #{tpu_custom_call.1} parent=1 // pred_check_branch
      %43 = sbr.rel (0) target = $region17
    $region16: #{tpu_custom_call.1} parent=1 // pred_region
      %s45 = ssub.s32 256, 256
      %46 = vsyncadd [#allocation4], %s45
      %s48 = sshll.u32 [#allocation5], 4
      %s49 = int_to_ptr.vmem [resolvable:$true] %s48
      %51 = dma.vmem_to_hbm [thread:$0]  %s49, 256, %s2, [#allocation4]
    $region17: #{tpu_custom_call.1} parent=1 // pred_fallthru
      _
    // Predicated region
    $region18: #{tpu_custom_call.1} parent=1 // pred_check
      _
    $region19: #{tpu_custom_call.1} parent=1 // pred_check_branch
      %53 = sbr.rel (0) target = $region21
    $region20: #{tpu_custom_call.1} parent=1 // pred_region
      %54 = dma.done [#allocation4], 256
    $region21: #{tpu_custom_call.1} parent=1 // pred_fallthru
      _
    %55 = vsyncpa [#allocation3], 1
    %56 = vsyncpa [#allocation4], 1

</llo_original>
